<compile_context>
chip_gen: v7x
topology: tpu7x:2x2x1
jax: 0.10.0
libtpu: 0.0.40
codegen_flags: <defaults>
</compile_context>

<pallas_src>
import functools

import jax
import jax.numpy as jnp
import numpy as np
from jax.experimental import pallas as pl
from jax.experimental.pallas import tpu as pltpu

LANE = 128
# bf16 for the covariance MXU contractions (f32 accumulation); the encode
# matmul stays f32 for relu-threshold accuracy of geff.
MATMUL_DTYPE = jnp.bfloat16
MM_BYTES = jnp.dtype(MATMUL_DTYPE).itemsize


# ----------------------------------------------------------------------------
# Small helpers: VMEM budget + tile selection with explicit byte asserts.
# ----------------------------------------------------------------------------
def _round_up(x, m):
    return (x + m - 1) // m * m


def _vmem_limit_bytes():
    """Scoped VMEM limit: ~3/4 of physical VMEM (v7x: 64 MiB -> 48 MiB,
    v5e/v6e: 128 MiB -> 96 MiB), capped at 100 MiB; conservative fallback."""
    cap = None
    try:
        cap = int(pltpu.get_tpu_info().vmem_capacity_bytes)
    except Exception:
        cap = None
    if not cap or cap <= 0:
        cap = 64 * 1024 * 1024
    return min(100 * 1024 * 1024, (cap * 3) // 4)


def _encode_vmem_bytes(tb, tk, jp):
    stream = 2 * (2 * tb * tk * 4)            # image + nx blocks, f32, 2 bufs
    w_blk = 2 * tk * jp * 4                   # W block, f32, 2 bufs
    small = 2 * 2 * 1 * jp * 4 + 2 * tb * jp * 4   # gain, bias, nr_std
    outs = 3 * 2 * tb * jp * 4                # z, r, geff blocks
    acc = tb * jp * 4                         # f32 accumulator scratch
    return stream + w_blk + small + outs + acc


def _cov_vmem_bytes(tk, jp, j8):
    c_blk = 2 * tk * tk * MM_BYTES            # data_cov tile
    w_blk = 2 * 2 * tk * jp * MM_BYTES        # W row-block + W col-block
    scr = 2 * jp * jp * 4                     # Mdata / Gram accumulators
    outs = 2 * 2 * j8 * jp * 4                # M_z, M_zx (tiny)
    return c_blk + w_blk + scr + outs


def _expand_vmem_bytes(tb, jp, j8):
    g = 2 * tb * (j8 + jp) * 4                # geff rows + geff full
    m = 2 * 2 * j8 * jp * 4                   # resident M_z / M_zx
    outs = 2 * 2 * tb * j8 * jp * 4           # C_z / C_zx blocks
    return g + m + outs


def _pick_batch_tile(B, bytes_fn, budget, what):
    """Batch tile: divisor of B, multiple of 8 (or the whole batch), <= 256,
    and >= ~4 grid steps when B >= 16, subject to the VMEM byte budget."""
    cands = [d for d in range(B, 0, -1) if B % d == 0 and (d % 8 == 0 or d == B)]
    cap = B if B < 16 else min(256, max(8, B // 4))
    fitting = [d for d in cands if bytes_fn(d) <= budget]
    if not fitting:
        raise ValueError(
            f"{what}: smallest batch tile ({cands[-1]}) exceeds the VMEM "
            f"budget of {budget} bytes (estimate {bytes_fn(cands[-1])}).")
    for d in fitting:
        if d <= cap:
            return d
    return fitting[-1]


def _pick_k_tile(LD, bytes_fn, budget, what):
    """LD (reduction) tile: divisor of LD, lane-aligned (multiple of 128) or
    the full LD, subject to the VMEM byte budget."""
    cands = [d for d in range(LD, 0, -1)
             if LD % d == 0 and (d % 128 == 0 or d == LD)]
    for d in cands:
        if bytes_fn(d) <= budget:
            return d
    raise ValueError(
        f"{what}: smallest LD tile ({cands[-1]}) exceeds the VMEM budget of "
        f"{budget} bytes (estimate {bytes_fn(cands[-1])}).")


# ----------------------------------------------------------------------------
# Kernel 1: encoder hot path.  Grid (batch-rows, LD-reduction).
#   x    = image + s_in * nx_std          (fused elementwise prep)
#   y    = x @ W                          (f32 MXU, K-tiled, f32 accumulator)
#   z    = gain * (y - bias) + s_out * nr_std
#   r    = gain * nonlin(y - bias)
#   geff = gain * d/dy nonlin(y - bias)
# ----------------------------------------------------------------------------
def _encode_kernel(img_ref, nx_ref, w_ref, gain_ref, bias_ref, nrstd_ref,
                   z_ref, r_ref, geff_ref, acc_ref, *,
                   s_in, s_out, nonlinearity):
    k = pl.program_id(1)

    @pl.when(k == 0)
    def _():
        acc_ref[...] = jnp.zeros_like(acc_ref)

    x = img_ref[...] + s_in * nx_ref[...]                       # (tb, tk)
    acc_ref[...] += jnp.dot(x, w_ref[...],
                            preferred_element_type=jnp.float32)  # (tb, Jp)

    @pl.when(k == pl.num_programs(1) - 1)
    def _():
        y = acc_ref[...]
        gain = gain_ref[...]                                    # (1, Jp)
        bias = bias_ref[...]                                    # (1, Jp)
        ymb = y - bias
        z_ref[...] = gain * ymb + s_out * nrstd_ref[...]
        if nonlinearity == "relu":
            r_ref[...] = gain * jnp.maximum(ymb, 0.0)
            grad = jnp.where(ymb > 0.0, 1.0, 0.0)
        else:  # matches F.softplus(y - bias, beta=2.5)
            beta = 2.5
            r_ref[...] = gain * (jax.nn.softplus(beta * ymb) / beta)
            grad = jax.nn.sigmoid(beta * ymb)
        geff_ref[...] = gain * grad


def encode(image2d, nx2d, Wp, gain_p, bias_p, nrstd_p,
           input_noise, output_noise, nonlinearity, vmem_limit, budget):
    B, LD = image2d.shape
    Jp = Wp.shape[1]
    tb = _pick_batch_tile(B, lambda t: _encode_vmem_bytes(t, min(LD, 512), Jp),
                          budget, "encode")
    tk = _pick_k_tile(LD, lambda t: _encode_vmem_bytes(tb, t, Jp),
                      budget, "encode")
    kernel = functools.partial(
        _encode_kernel, s_in=float(input_noise), s_out=float(output_noise),
        nonlinearity=nonlinearity)
    out_shape = tuple(jax.ShapeDtypeStruct((B, Jp), jnp.float32)
                      for _ in range(3))
    row = lambda b, k: (b, 0)
    return pl.pallas_call(
        kernel,
        out_shape=out_shape,
        grid_spec=pltpu.PrefetchScalarGridSpec(
            num_scalar_prefetch=0,
            grid=(B // tb, LD // tk),
            in_specs=[
                pl.BlockSpec((tb, tk), lambda b, k: (b, k)),   # image
                pl.BlockSpec((tb, tk), lambda b, k: (b, k)),   # nx_std
                pl.BlockSpec((tk, Jp), lambda b, k: (k, 0)),   # W (f32, streamed)
                pl.BlockSpec((1, Jp), lambda b, k: (0, 0)),    # gain
                pl.BlockSpec((1, Jp), lambda b, k: (0, 0)),    # bias
                pl.BlockSpec((tb, Jp), row),                   # nr_std
            ],
            out_specs=(pl.BlockSpec((tb, Jp), row),
                       pl.BlockSpec((tb, Jp), row),
                       pl.BlockSpec((tb, Jp), row)),
            scratch_shapes=[pltpu.VMEM((tb, Jp), jnp.float32)],
        ),
        compiler_params=pltpu.CompilerParams(
            dimension_semantics=("parallel", "arbitrary"),
            vmem_limit_bytes=vmem_limit),
    )(image2d, nx2d, Wp, gain_p, bias_p, nrstd_p)


# ----------------------------------------------------------------------------
# Kernel 2: covariance reduction.  2-D K-tiled over both data_cov axes:
#   Mdata = sum_{r,c} W[r]^T C[r,c] W[c]      (== W^T C W; data_cov symmetric)
#   G     = sum_r    W[r]^T W[r]              (Gram, accumulated when c == 0)
#   M_zx  = s_in^2 * G[:J8, :]                (algebraic W^T C_nx W)
#   M_z   = Mdata[:J8, :] + M_zx
# bf16 MXU operands, f32 accumulation in VMEM scratch.
# ----------------------------------------------------------------------------
def _cov_reduce_kernel(c_ref, wr_ref, wc_ref, mz_ref, mzx_ref,
                       mdata_acc, gram_acc, *, s_in2):
    r = pl.program_id(0)
    c = pl.program_id(1)

    @pl.when((r == 0) & (c == 0))
    def _():
        mdata_acc[...] = jnp.zeros_like(mdata_acc)
        gram_acc[...] = jnp.zeros_like(gram_acc)

    dims = (((0,), (0,)), ((), ()))          # contract dim 0 of both operands
    wr = wr_ref[...]                         # (tk, Jp) bf16
    t = jnp.dot(c_ref[...], wc_ref[...],
                preferred_element_type=jnp.float32)             # (tk, Jp) f32
    mdata_acc[...] += jax.lax.dot_general(
        wr, t.astype(wr.dtype), dims, preferred_element_type=jnp.float32)

    @pl.when(c == 0)
    def _():
        gram_acc[...] += jax.lax.dot_general(
            wr, wr, dims, preferred_element_type=jnp.float32)

    @pl.when((r == pl.num_programs(0) - 1) & (c == pl.num_programs(1) - 1))
    def _():
        j8 = mz_ref.shape[0]
        m_zx = s_in2 * gram_acc[pl.ds(0, j8), :]
        mzx_ref[...] = m_zx
        mz_ref[...] = mdata_acc[pl.ds(0, j8), :] + m_zx


def cov_reduce(data_cov_mm, Wp_mm, J8, input_noise, vmem_limit, budget):
    LD, Jp = Wp_mm.shape
    tk = _pick_k_tile(LD, lambda t: _cov_vmem_bytes(t, Jp, J8),
                      budget, "cov_reduce")
    nk = LD // tk
    kernel = functools.partial(_cov_reduce_kernel,
                               s_in2=float(input_noise) ** 2)
    out_shape = (jax.ShapeDtypeStruct((J8, Jp), jnp.float32),   # M_z
                 jax.ShapeDtypeStruct((J8, Jp), jnp.float32))   # M_zx
    rep = lambda r, c: (0, 0)
    return pl.pallas_call(
        kernel,
        out_shape=out_shape,
        grid_spec=pltpu.PrefetchScalarGridSpec(
            num_scalar_prefetch=0,
            grid=(nk, nk),
            in_specs=[
                pl.BlockSpec((tk, tk), lambda r, c: (r, c)),   # data_cov tile
                pl.BlockSpec((tk, Jp), lambda r, c: (r, 0)),   # W row block
                pl.BlockSpec((tk, Jp), lambda r, c: (c, 0)),   # W col block
            ],
            out_specs=(pl.BlockSpec((J8, Jp), rep),
                       pl.BlockSpec((J8, Jp), rep)),
            scratch_shapes=[pltpu.VMEM((Jp, Jp), jnp.float32),
                            pltpu.VMEM((Jp, Jp), jnp.float32)],
        ),
        compiler_params=pltpu.CompilerParams(
            dimension_semantics=("arbitrary", "arbitrary"),
            vmem_limit_bytes=vmem_limit),
    )(data_cov_mm, Wp_mm, Wp_mm)


# ----------------------------------------------------------------------------
# Kernel 3: batch-tiled covariance expansion (parallel over batch rows):
#   C_*[b] = geff[b, :J8, None] * M_* * geff[b, None, :] + s_out^2 * I
# ----------------------------------------------------------------------------
def _expand_kernel(grow_ref, gfull_ref, mz_ref, mzx_ref, cz_ref, czx_ref, *,
                   s_out2):
    j8, jp = mz_ref.shape
    gl = grow_ref[...][:, :, None]                      # (tb, J8, 1)
    gr = gfull_ref[...][:, None, :]                     # (tb, 1, Jp)
    scale = gl * gr                                     # (tb, J8, Jp)
    rows = jax.lax.broadcasted_iota(jnp.int32, (j8, jp), 0)
    cols = jax.lax.broadcasted_iota(jnp.int32, (j8, jp), 1)
    diag = jnp.where(rows == cols, s_out2, 0.0).astype(jnp.float32)
    cz_ref[...] = scale * mz_ref[...][None, :, :] + diag[None, :, :]
    czx_ref[...] = scale * mzx_ref[...][None, :, :] + diag[None, :, :]


def expand_cov(geff_rows, geff_full, m_z, m_zx, output_noise,
               vmem_limit, budget):
    B, Jp = geff_full.shape
    J8 = geff_rows.shape[1]
    tb = _pick_batch_tile(B, lambda t: _expand_vmem_bytes(t, Jp, J8),
                          budget, "expand_cov")
    kernel = functools.partial(_expand_kernel, s_out2=float(output_noise) ** 2)
    out_shape = (jax.ShapeDtypeStruct((B, J8, Jp), jnp.float32),   # C_z
                 jax.ShapeDtypeStruct((B, J8, Jp), jnp.float32))   # C_zx
    row3 = lambda b: (b, 0, 0)
    rep = lambda b: (0, 0)
    return pl.pallas_call(
        kernel,
        out_shape=out_shape,
        grid_spec=pltpu.PrefetchScalarGridSpec(
            num_scalar_prefetch=0,
            grid=(B // tb,),
            in_specs=[
                pl.BlockSpec((tb, J8), lambda b: (b, 0)),   # geff rows (J8)
                pl.BlockSpec((tb, Jp), lambda b: (b, 0)),   # geff full (Jp)
                pl.BlockSpec((J8, Jp), rep),                # M_z (resident)
                pl.BlockSpec((J8, Jp), rep),                # M_zx (resident)
            ],
            out_specs=(pl.BlockSpec((tb, J8, Jp), row3),
                       pl.BlockSpec((tb, J8, Jp), row3)),
        ),
        compiler_params=pltpu.CompilerParams(
            dimension_semantics=("parallel",),
            vmem_limit_bytes=vmem_limit),
    )(geff_rows, geff_full, m_z, m_zx)


# ----------------------------------------------------------------------------
# Encoder forward (wrapper: lane-pad J, call the three kernels, slice back).
# ----------------------------------------------------------------------------
def encoder_forward(params, image, nx_std, nr_std,
                    input_noise, output_noise, nonlinearity):
    W, logA, logB, data_cov = params
    B, L, D = image.shape
    LD = L * D
    J = W.shape[1]
    Jp = _round_up(J, LANE)          # lane-pad the neuron axis to 128
    J8 = _round_up(J, 8)             # sublane-pad for the covariance row dim
    pad = Jp - J

    vmem_limit = _vmem_limit_bytes()
    budget = int(vmem_limit * 0.8)   # tile-selection headroom

    gain = jnp.exp(logA)
    bias = jnp.exp(logB)

    Wp = jnp.pad(W, ((0, 0), (0, pad)))
    gain_p = jnp.pad(gain, (0, pad)).reshape(1, Jp)
    bias_p = jnp.pad(bias, (0, pad)).reshape(1, Jp)
    nrstd_p = jnp.pad(nr_std, ((0, 0), (0, pad)))

    image2d = image.reshape(B, LD)
    nx2d = nx_std.reshape(B, LD)

    # 1) encode: z, r, effective gain (f32 MXU for threshold-accurate geff).
    z_p, r_p, geff_p = encode(image2d, nx2d, Wp, gain_p, bias_p, nrstd_p,
                              input_noise, output_noise, nonlinearity,
                              vmem_limit, budget)

    # 2) covariance reduction in bf16 (one-time wrapper-side casts).
    #    NOTE: assumes data_covariance is symmetric (it is a covariance), so
    #    W^T C W == W^T C^T W as in the PyTorch matrix_spatiotemporal.
    Wp_mm = Wp.astype(MATMUL_DTYPE)
    cov_mm = data_cov.astype(MATMUL_DTYPE)
    m_z, m_zx = cov_reduce(cov_mm, Wp_mm, J8, input_noise, vmem_limit, budget)

    # 3) batch-tiled expansion to (B, J8, Jp).
    geff_rows = geff_p[:, :J8]
    C_z_p, C_zx_p = expand_cov(geff_rows, geff_p, m_z, m_zx, output_noise,
                               vmem_limit, budget)

    return (z_p[:, :J], r_p[:, :J], C_z_p[:, :J, :J], C_zx_p[:, :J, :J])


# ----------------------------------------------------------------------------
# Pure-JAX reference (mirrors the PyTorch forward exactly)
# ----------------------------------------------------------------------------
def reference_forward(params, image, nx_std, nr_std,
                      input_noise, output_noise, nonlinearity):
    W, logA, logB, data_cov = params
    B, L, D = image.shape
    LD = L * D
    J = W.shape[1]
    gain = jnp.exp(logA)
    bias = jnp.exp(logB)

    x = (image + input_noise * nx_std).reshape(B, LD)
    y = x @ W
    ymb = y - bias
    z = gain * ymb + output_noise * nr_std
    if nonlinearity == "relu":
        r = gain * jnp.maximum(ymb, 0.0)
        grad = (ymb > 0.0).astype(jnp.float32)
    else:
        r = gain * (jax.nn.softplus(2.5 * ymb) / 2.5)
        grad = jax.nn.sigmoid(2.5 * ymb)
    geff = gain * grad

    def mst(C):
        t = C @ W                       # (LD, J)
        M = t.T @ W                     # (J, J)
        return geff[:, :, None] * M * geff[:, None, :]

    C_nx = (input_noise ** 2) * jnp.eye(LD, dtype=jnp.float32)
    C_nr = (output_noise ** 2) * jnp.eye(J, dtype=jnp.float32)
    C_zx = mst(C_nx) + C_nr
    C_z = mst(data_cov + C_nx) + C_nr
    return z, r, C_z, C_zx


if __name__ == "__main__":
    # Small, module-consistent shapes.
    kernel_size = 8
    n_colors = 2                     # L (image channels)
    D = kernel_size * kernel_size    # 64
    LD = n_colors * D                # 128
    J = 16                           # neurons (must be even)
    B = 4                            # batch
    input_noise = 0.1
    output_noise = 0.05
    nonlinearity = "relu"

    key = jax.random.PRNGKey(0)
    kW, kA, kB_, kC, kimg, knx, knr = jax.random.split(key, 7)

    # Deterministic parameter init, matching __init__ shapes/scales.
    W = 0.02 * jax.random.normal(kW, (LD, J), jnp.float32)
    W = W / jnp.linalg.norm(W, axis=0, keepdims=True)
    logA = 0.02 * jax.random.normal(kA, (J,), jnp.float32)
    logB = 0.02 * jax.random.normal(kB_, (J,), jnp.float32) - 1.0
    A = jax.random.normal(kC, (LD, LD), jnp.float32)
    data_cov = (A @ A.T) / LD        # symmetric PSD "data_covariance" buffer
    params = (W, logA, logB, data_cov)

    image = jax.random.normal(kimg, (B, n_colors, D), jnp.float32)
    nx_std = jax.random.normal(knx, (B, n_colors, D), jnp.float32)
    nr_std = jax.random.normal(knr, (B, J), jnp.float32)

    z, r, C_z, C_zx = encoder_forward(
        params, image, nx_std, nr_std, input_noise, output_noise, nonlinearity)
    jax.block_until_ready((z, r, C_z, C_zx))

    z_ref, r_ref, C_z_ref, C_zx_ref = reference_forward(
        params, image, nx_std, nr_std, input_noise, output_noise, nonlinearity)

    np.testing.assert_allclose(np.asarray(z), np.asarray(z_ref), rtol=1e-2, atol=1e-3)
    np.testing.assert_allclose(np.asarray(r), np.asarray(r_ref), rtol=1e-2, atol=1e-3)
    np.testing.assert_allclose(np.asarray(C_z), np.asarray(C_z_ref), rtol=1e-2, atol=1e-3)
    np.testing.assert_allclose(np.asarray(C_zx), np.asarray(C_zx_ref), rtol=1e-2, atol=1e-3)

    assert z.shape == (B, J) and r.shape == (B, J)
    assert C_z.shape == (B, J, J) and C_zx.shape == (B, J, J)
    print("KERNEL_OK")
</pallas_src>

<mosaic_0001>
module attributes {stable_mosaic.version = 11 : i64} {
  func.func @_encode_kernel(%arg0: i32, %arg1: i32, %arg2: memref<4x128xf32, #tpu.memory_space<vmem>>, %arg3: memref<4x128xf32, #tpu.memory_space<vmem>>, %arg4: memref<128x128xf32, #tpu.memory_space<vmem>>, %arg5: memref<1x128xf32, #tpu.memory_space<vmem>>, %arg6: memref<1x128xf32, #tpu.memory_space<vmem>>, %arg7: memref<4x128xf32, #tpu.memory_space<vmem>>, %arg8: memref<4x128xf32, #tpu.memory_space<vmem>>, %arg9: memref<4x128xf32, #tpu.memory_space<vmem>>, %arg10: memref<4x128xf32, #tpu.memory_space<vmem>>, %arg11: memref<4x128xf32, #tpu.memory_space<vmem>>) attributes {dimension_semantics = [#tpu.dimension_semantics<parallel>, #tpu.dimension_semantics<arbitrary>], iteration_bounds = array<i64: 1, 1>, scalar_prefetch = 0 : i64, scratch_operands = 1 : i64, tpu.core_type = #tpu.core_type<tc>, window_params = [{transform_indices = @transform_0, window_bounds = array<i64: 4, 128>}, {transform_indices = @transform_1, window_bounds = array<i64: 4, 128>}, {transform_indices = @transform_2, window_bounds = array<i64: 128, 128>}, {pipeline_mode = #tpu.pipeline_mode<synchronous>, transform_indices = @transform_3, window_bounds = array<i64: 1, 128>}, {pipeline_mode = #tpu.pipeline_mode<synchronous>, transform_indices = @transform_4, window_bounds = array<i64: 1, 128>}, {transform_indices = @transform_5, window_bounds = array<i64: 4, 128>}, {transform_indices = @transform_6, window_bounds = array<i64: 4, 128>}, {transform_indices = @transform_7, window_bounds = array<i64: 4, 128>}, {transform_indices = @transform_8, window_bounds = array<i64: 4, 128>}]} {
    %c0_i32 = arith.constant 0 : i32
    %0 = arith.cmpi eq, %arg1, %c0_i32 : i32
    %1 = arith.extui %0 : i1 to i32
    %c0_i32_0 = arith.constant 0 : i32
    %2 = arith.cmpi ne, %1, %c0_i32_0 : i32
    scf.if %2 {
      %cst_13 = arith.constant 0.000000e+00 : f32
      %16 = vector.broadcast %cst_13 : f32 to vector<4x128xf32>
      %c0_14 = arith.constant 0 : index
      %c0_15 = arith.constant 0 : index
      %17 = vector.load %arg11[%c0_14, %c0_15] : memref<4x128xf32, #tpu.memory_space<vmem>>, vector<4x128xf32>
      tpu.vector_store %arg11[%c0_14, %c0_15], %16 {strides = array<i32>} : memref<4x128xf32, #tpu.memory_space<vmem>>, vector<4x128xf32>,
    } else {
    }
    %c0 = arith.constant 0 : index
    %c0_1 = arith.constant 0 : index
    %3 = vector.load %arg2[%c0, %c0_1] : memref<4x128xf32, #tpu.memory_space<vmem>>, vector<4x128xf32>
    %c0_2 = arith.constant 0 : index
    %c0_3 = arith.constant 0 : index
    %4 = vector.load %arg3[%c0_2, %c0_3] : memref<4x128xf32, #tpu.memory_space<vmem>>, vector<4x128xf32>
    %cst = arith.constant 1.000000e-01 : f32
    %5 = vector.broadcast %cst : f32 to vector<4x128xf32>
    %6 = arith.mulf %5, %4 : vector<4x128xf32>
    %7 = arith.addf %3, %6 : vector<4x128xf32>
    %c0_4 = arith.constant 0 : index
    %c0_5 = arith.constant 0 : index
    %8 = vector.load %arg11[%c0_4, %c0_5] : memref<4x128xf32, #tpu.memory_space<vmem>>, vector<4x128xf32>
    %c0_6 = arith.constant 0 : index
    %c0_7 = arith.constant 0 : index
    %9 = vector.load %arg4[%c0_6, %c0_7] : memref<128x128xf32, #tpu.memory_space<vmem>>, vector<128x128xf32>
    %cst_8 = arith.constant dense<0.000000e+00> : vector<4x128xf32>
    %10 = tpu.matmul %7, %9, %cst_8 {dimension_numbers = #tpu.dot_dimension_numbers<[1], [0], [0], [1], [0, 0, 1, 1], [], []>} : vector<4x128xf32>, vector<128x128xf32>, vector<4x128xf32> -> vector<4x128xf32>
    %11 = arith.addf %8, %10 : vector<4x128xf32>
    %c0_9 = arith.constant 0 : index
    %c0_10 = arith.constant 0 : index
    %12 = vector.load %arg11[%c0_9, %c0_10] : memref<4x128xf32, #tpu.memory_space<vmem>>, vector<4x128xf32>
    tpu.vector_store %arg11[%c0_9, %c0_10], %11 {strides = array<i32>} : memref<4x128xf32, #tpu.memory_space<vmem>>, vector<4x128xf32>,
    %c0_i32_11 = arith.constant 0 : i32
    %13 = arith.cmpi eq, %arg1, %c0_i32_11 : i32
    %14 = arith.extui %13 : i1 to i32
    %c0_i32_12 = arith.constant 0 : i32
    %15 = arith.cmpi ne, %14, %c0_i32_12 : i32
    scf.if %15 {
      %c0_13 = arith.constant 0 : index
      %c0_14 = arith.constant 0 : index
      %16 = vector.load %arg11[%c0_13, %c0_14] : memref<4x128xf32, #tpu.memory_space<vmem>>, vector<4x128xf32>
      %c0_15 = arith.constant 0 : index
      %c0_16 = arith.constant 0 : index
      %17 = vector.load %arg5[%c0_15, %c0_16] : memref<1x128xf32, #tpu.memory_space<vmem>>, vector<1x128xf32>
      %c0_17 = arith.constant 0 : index
      %c0_18 = arith.constant 0 : index
      %18 = vector.load %arg6[%c0_17, %c0_18] : memref<1x128xf32, #tpu.memory_space<vmem>>, vector<1x128xf32>
      %19 = vector.broadcast %18 : vector<1x128xf32> to vector<4x128xf32>
      %20 = arith.subf %16, %19 : vector<4x128xf32>
      %21 = vector.broadcast %17 : vector<1x128xf32> to vector<4x128xf32>
      %22 = arith.mulf %21, %20 : vector<4x128xf32>
      %c0_19 = arith.constant 0 : index
      %c0_20 = arith.constant 0 : index
      %23 = vector.load %arg7[%c0_19, %c0_20] : memref<4x128xf32, #tpu.memory_space<vmem>>, vector<4x128xf32>
      %cst_21 = arith.constant 5.000000e-02 : f32
      %24 = vector.broadcast %cst_21 : f32 to vector<4x128xf32>
      %25 = arith.mulf %24, %23 : vector<4x128xf32>
      %26 = arith.addf %22, %25 : vector<4x128xf32>
      %c0_22 = arith.constant 0 : index
      %c0_23 = arith.constant 0 : index
      %27 = vector.load %arg8[%c0_22, %c0_23] : memref<4x128xf32, #tpu.memory_space<vmem>>, vector<4x128xf32>
      tpu.vector_store %arg8[%c0_22, %c0_23], %26 {strides = array<i32>} : memref<4x128xf32, #tpu.memory_space<vmem>>, vector<4x128xf32>,
      %cst_24 = arith.constant 0.000000e+00 : f32
      %28 = vector.broadcast %cst_24 : f32 to vector<4x128xf32>
      %29 = arith.maximumf %20, %28 : vector<4x128xf32>
      %30 = vector.broadcast %17 : vector<1x128xf32> to vector<4x128xf32>
      %31 = arith.mulf %30, %29 : vector<4x128xf32>
      %c0_25 = arith.constant 0 : index
      %c0_26 = arith.constant 0 : index
      %32 = vector.load %arg9[%c0_25, %c0_26] : memref<4x128xf32, #tpu.memory_space<vmem>>, vector<4x128xf32>
      tpu.vector_store %arg9[%c0_25, %c0_26], %31 {strides = array<i32>} : memref<4x128xf32, #tpu.memory_space<vmem>>, vector<4x128xf32>,
      %cst_27 = arith.constant 0.000000e+00 : f32
      %33 = vector.broadcast %cst_27 : f32 to vector<4x128xf32>
      %34 = arith.cmpf ogt, %20, %33 : vector<4x128xf32>
      %cst_28 = arith.constant 1.000000e+00 : f32
      %cst_29 = arith.constant 0.000000e+00 : f32
      %35 = vector.broadcast %cst_28 : f32 to vector<4x128xf32>
      %36 = vector.broadcast %cst_29 : f32 to vector<4x128xf32>
      %37 = arith.select %34, %35, %36 : vector<4x128xi1>, vector<4x128xf32>
      %38 = vector.broadcast %17 : vector<1x128xf32> to vector<4x128xf32>
      %39 = arith.mulf %38, %37 : vector<4x128xf32>
      %c0_30 = arith.constant 0 : index
      %c0_31 = arith.constant 0 : index
      %40 = vector.load %arg10[%c0_30, %c0_31] : memref<4x128xf32, #tpu.memory_space<vmem>>, vector<4x128xf32>
      tpu.vector_store %arg10[%c0_30, %c0_31], %39 {strides = array<i32>} : memref<4x128xf32, #tpu.memory_space<vmem>>, vector<4x128xf32>,
    } else {
    }
    return
  }
  func.func @transform_0(%arg0: i32, %arg1: i32) -> (i32, i32) {
    %c0_i32 = arith.constant 0 : i32
    return %arg0, %arg1 : i32, i32
  }
  func.func @transform_1(%arg0: i32, %arg1: i32) -> (i32, i32) {
    %c0_i32 = arith.constant 0 : i32
    return %arg0, %arg1 : i32, i32
  }
  func.func @transform_2(%arg0: i32, %arg1: i32) -> (i32, i32) {
    %c0_i32 = arith.constant 0 : i32
    %c0_i32_0 = arith.constant 0 : i32
    return %arg1, %c0_i32 : i32, i32
  }
  func.func @transform_3(%arg0: i32, %arg1: i32) -> (i32, i32) {
    %c0_i32 = arith.constant 0 : i32
    %c0_i32_0 = arith.constant 0 : i32
    %c0_i32_1 = arith.constant 0 : i32
    return %c0_i32, %c0_i32_0 : i32, i32
  }
  func.func @transform_4(%arg0: i32, %arg1: i32) -> (i32, i32) {
    %c0_i32 = arith.constant 0 : i32
    %c0_i32_0 = arith.constant 0 : i32
    %c0_i32_1 = arith.constant 0 : i32
    return %c0_i32, %c0_i32_0 : i32, i32
  }
  func.func @transform_5(%arg0: i32, %arg1: i32) -> (i32, i32) {
    %c0_i32 = arith.constant 0 : i32
    %c0_i32_0 = arith.constant 0 : i32
    return %arg0, %c0_i32 : i32, i32
  }
  func.func @transform_6(%arg0: i32, %arg1: i32) -> (i32, i32) {
    %c0_i32 = arith.constant 0 : i32
    %c0_i32_0 = arith.constant 0 : i32
    return %arg0, %c0_i32 : i32, i32
  }
  func.func @transform_7(%arg0: i32, %arg1: i32) -> (i32, i32) {
    %c0_i32 = arith.constant 0 : i32
    %c0_i32_0 = arith.constant 0 : i32
    return %arg0, %c0_i32 : i32, i32
  }
  func.func @transform_8(%arg0: i32, %arg1: i32) -> (i32, i32) {
    %c0_i32 = arith.constant 0 : i32
    %c0_i32_0 = arith.constant 0 : i32
    return %arg0, %c0_i32 : i32, i32
  }
}

</mosaic_0001>

<llo_original>
// kernel: tpu_custom_call.1
$region0: #{tpu_custom_call.1}
  #allocation0 [shape = 'u32[]', space=smem, size = 0x4, offset = 0x4, fixed_abs, tag = 'smem constant byte address 0x4 - core index']
  #allocation1 [shape = 'u32[144,128]{1,0:T(1,128)}', space=vmem, size = 0x12000, scoped, tag = 'internal scratch']
  #allocation2 [shape = 'f32[4,128]{1,0:T(4,128)}', space=vmem, size = 0x800, scoped, tag = 'scratch operand']
  %s0 = inlined_call_operand.hbm [shape: f32[4,128], index: 0, kind: input, shape index: {}]
  %s1 = inlined_call_operand.hbm [shape: f32[4,128], index: 1, kind: input, shape index: {}]
  %s2 = inlined_call_operand.hbm [shape: f32[128,128], index: 2, kind: input, shape index: {}]
  %s3 = inlined_call_operand.vmem [shape: f32[1,128], index: 3, kind: input, shape index: {}]
  %s4 = inlined_call_operand.vmem [shape: f32[1,128], index: 4, kind: input, shape index: {}]
  %s5 = inlined_call_operand.vmem [shape: f32[4,128], index: 5, kind: input, shape index: {}]
  %s6 = inlined_call_operand.hbm [shape: f32[4,128], index: 6, kind: output, shape index: {0}]
  %s7 = inlined_call_operand.hbm [shape: f32[4,128], index: 7, kind: output, shape index: {1}]
  %s8 = inlined_call_operand.hbm [shape: f32[4,128], index: 8, kind: output, shape index: {2}]
  %9 = xla_tuple %s6, %s7, %s8
  %s10 = sld [smem:[#allocation0]]
  $region70: #{tpu_custom_call.1} parent=0
    _
  %s12 = ssub.s32 1, %s10
  %s13 = scalar_select 0, %s12, %s10
  $region1: #{tpu_custom_call.1} parent=0
    #allocation3 [shape = 'u8[2048]{0}', space=vmem, size = 0x800, scoped, tag = 'input window, operand 0, single buffered']
    #allocation4 [shape = 's32[1]{0}', space=sflag, size = 0x4, scoped, tag = 'scoped memory for tpu_custom_call.1']
    #allocation5 [shape = 's32[1]{0}', space=sflag, size = 0x4, scoped, tag = 'scoped memory for tpu_custom_call.1']
    #allocation6 [shape = 'u8[2048]{0}', space=vmem, size = 0x800, scoped, tag = 'input window, operand 1, single buffered']
    #allocation7 [shape = 's32[1]{0}', space=sflag, size = 0x4, scoped, tag = 'scoped memory for tpu_custom_call.1']
    #allocation8 [shape = 'u8[65536]{0}', space=vmem, size = 0x10000, scoped, tag = 'input window, operand 2, single buffered']
    #allocation9 [shape = 'u8[2048]{0}', space=vmem, size = 0x800, scoped, tag = 'output window, operand 0, single buffered']
    #allocation10 [shape = 'u8[2048]{0}', space=vmem, size = 0x800, scoped, tag = 'output window, operand 1, single buffered']
    #allocation11 [shape = 's32[1]{0}', space=sflag, size = 0x4, scoped, tag = 'scoped memory for tpu_custom_call.1']
    #allocation12 [shape = 'u8[2048]{0}', space=vmem, size = 0x800, scoped, tag = 'output window, operand 2, single buffered']
    %14 = vsyncpa [#allocation4], 0
    %15 = vsyncpa [#allocation7], 0
    %16 = vsyncpa [#allocation5], 0
    %17 = vsyncpa [#allocation11], 0
    // Predicated region
    $region2: #{tpu_custom_call.1} parent=1 // pred_check
      _
    $region3: #{tpu_custom_call.1} parent=1 // pred_check_branch
      %19 = sbr.rel (0) target = $region5
    $region4: #{tpu_custom_call.1} parent=1 // pred_region
      %s21 = ssub.s32 64, 64
      %22 = vsyncadd [#allocation4], %s21
      %s24 = sshll.u32 [#allocation3], 4
      %s25 = int_to_ptr.vmem [resolvable:$true] %s24
      %27 = dma.hbm_to_vmem [thread:$0]  %s0, 64, %s25, [#allocation4]
    $region5: #{tpu_custom_call.1} parent=1 // pred_fallthru
      _
    // Predicated region
    $region6: #{tpu_custom_call.1} parent=1 // pred_check
      _
    $region7: #{tpu_custom_call.1} parent=1 // pred_check_branch
      %29 = sbr.rel (0) target = $region9
    $region8: #{tpu_custom_call.1} parent=1 // pred_region
      %s31 = ssub.s32 64, 64
      %32 = vsyncadd [#allocation7], %s31
      %s34 = sshll.u32 [#allocation6], 4
      %s35 = int_to_ptr.vmem [resolvable:$true] %s34
      %37 = dma.hbm_to_vmem [thread:$0]  %s1, 64, %s35, [#allocation7]
    $region9: #{tpu_custom_call.1} parent=1 // pred_fallthru
      _
    // Predicated region
    $region10: #{tpu_custom_call.1} parent=1 // pred_check
      _
    $region11: #{tpu_custom_call.1} parent=1 // pred_check_branch
      %39 = sbr.rel (0) target = $region13
    $region12: #{tpu_custom_call.1} parent=1 // pred_region
      %s41 = ssub.s32 2048, 2048
      %42 = vsyncadd [#allocation7], %s41
      %s43 = sshll.u32 [#allocation8], 4
      %s44 = int_to_ptr.vmem [resolvable:$true] %s43
      %49 = dma.hbm_to_vmem [thread:$0]  %s2, 2048, %s44, [#allocation7], 128, 128, 8
    $region13: #{tpu_custom_call.1} parent=1 // pred_fallthru
      _
    // Predicated region
    $region14: #{tpu_custom_call.1} parent=1 // pred_check
      _
    $region15: #{tpu_custom_call.1} parent=1 // pred_check_branch
      %51 = sbr.rel (0) target = $region17
    $region16: #{tpu_custom_call.1} parent=1 // pred_region
      _
    $region17: #{tpu_custom_call.1} parent=1 // pred_fallthru
      _
    // Predicated region
    $region18: #{tpu_custom_call.1} parent=1 // pred_check
      _
    $region19: #{tpu_custom_call.1} parent=1 // pred_check_branch
      %53 = sbr.rel (0) target = $region21
    $region20: #{tpu_custom_call.1} parent=1 // pred_region
      _
    $region21: #{tpu_custom_call.1} parent=1 // pred_fallthru
      _
    // Predicated region
    $region22: #{tpu_custom_call.1} parent=1 // pred_check
      _
    $region23: #{tpu_custom_call.1} parent=1 // pred_check_branch
      %55 = sbr.rel (0) target = $region25
    $region24: #{tpu_custom_call.1} parent=1 // pred_region
      _
    $region25: #{tpu_custom_call.1} parent=1 // pred_fallthru
      _
    // Predicated region
    $region26: #{tpu_custom_call.1} parent=1 // pred_check
      _
    $region27: #{tpu_custom_call.1} parent=1 // pred_check_branch
      %57 = sbr.rel (0) target = $region29
    $region28: #{tpu_custom_call.1} parent=1 // pred_region
      %58 = dma.done [#allocation4], 64
    $region29: #{tpu_custom_call.1} parent=1 // pred_fallthru
      _
    // Predicated region
    $region30: #{tpu_custom_call.1} parent=1 // pred_check
      _
    $region31: #{tpu_custom_call.1} parent=1 // pred_check_branch
      %60 = sbr.rel (0) target = $region33
    $region32: #{tpu_custom_call.1} parent=1 // pred_region
      %61 = dma.done [#allocation7], 64
    $region33: #{tpu_custom_call.1} parent=1 // pred_fallthru
      _
    // Predicated region
    $region34: #{tpu_custom_call.1} parent=1 // pred_check
      _
    $region35: #{tpu_custom_call.1} parent=1 // pred_check_branch
      %63 = sbr.rel (0) target = $region37
    $region36: #{tpu_custom_call.1} parent=1 // pred_region
      %64 = dma.done [#allocation7], 2048
    $region37: #{tpu_custom_call.1} parent=1 // pred_fallthru
      _
    %p65 = scmp.eq.s32.totalorder 0, 0
    // Predicated region
    $region38: #{tpu_custom_call.1} parent=1 // pred_check
      %p66 = pneg %p65
    $region39: #{tpu_custom_call.1} parent=1 // pred_check_branch
      %68 = sbr.rel (%p66) target = $region41
    $region40: #{tpu_custom_call.1} parent=1 // pred_region
      %69 = vst [vmem:[#allocation2] sm:$0xf] 0.0
    $region41: #{tpu_custom_call.1} parent=1 // pred_fallthru
      _
    %v70 = vld [vmem:[#allocation3] sm:$0xf]
    %v71 = vld [vmem:[#allocation6] sm:$0xf]
    %v72 = vmul.f32 %v71, 0.1
    %v73 = vadd.f32 %v70, %v72
    %v74 = vld [vmem:[#allocation2] sm:$0xf]
    %v75 = vld [vmem:[#allocation8] sm:$0xff]
    %v76 = vld [vmem:[#allocation8 + $0x8] sm:$0xff]
    %v77 = vld [vmem:[#allocation8 + $0x10] sm:$0xff]
    %v78 = vld [vmem:[#allocation8 + $0x18] sm:$0xff]
    %v79 = vld [vmem:[#allocation8 + $0x20] sm:$0xff]
    %v80 = vld [vmem:[#allocation8 + $0x28] sm:$0xff]
    %v81 = vld [vmem:[#allocation8 + $0x30] sm:$0xff]
    %v82 = vld [vmem:[#allocation8 + $0x38] sm:$0xff]
    %v83 = vld [vmem:[#allocation8 + $0x40] sm:$0xff]
    %v84 = vld [vmem:[#allocation8 + $0x48] sm:$0xff]
    %v85 = vld [vmem:[#allocation8 + $0x50] sm:$0xff]
    %v86 = vld [vmem:[#allocation8 + $0x58] sm:$0xff]
    %v87 = vld [vmem:[#allocation8 + $0x60] sm:$0xff]
    %v88 = vld [vmem:[#allocation8 + $0x68] sm:$0xff]
    %v89 = vld [vmem:[#allocation8 + $0x70] sm:$0xff]
    %v90 = vld [vmem:[#allocation8 + $0x78] sm:$0xff]
    %91 = vmatprep.subr.mxu0 0.0
    %92 = vmatpush1.msra.mxu0 %v75
    %93 = vmatprep.subr.mxu0 0.0
    %94 = vmatpush1.msra.mxu0 %v76
    %95 = vmatprep.subr.mxu0 0.0
    %96 = vmatpush1.msra.mxu0 %v77
    %97 = vmatprep.subr.mxu0 0.0
    %98 = vmatpush1.msra.mxu0 %v78
    %99 = vmatprep.subr.mxu0 0.0
    %100 = vmatpush1.msra.mxu0 %v79
    %101 = vmatprep.subr.mxu0 0.0
    %102 = vmatpush1.msra.mxu0 %v80
    %103 = vmatprep.subr.mxu0 0.0
    %104 = vmatpush1.msra.mxu0 %v81
    %105 = vmatprep.subr.mxu0 0.0
    %106 = vmatpush1.msra.mxu0 %v82
    %107 = vmatprep.subr.mxu0 0.0
    %108 = vmatpush1.msra.mxu0 %v83
    %109 = vmatprep.subr.mxu0 0.0
    %110 = vmatpush1.msra.mxu0 %v84
    %111 = vmatprep.subr.mxu0 0.0
    %112 = vmatpush1.msra.mxu0 %v85
    %113 = vmatprep.subr.mxu0 0.0
    %114 = vmatpush1.msra.mxu0 %v86
    %115 = vmatprep.subr.mxu0 0.0
    %116 = vmatpush1.msra.mxu0 %v87
    %117 = vmatprep.subr.mxu0 0.0
    %118 = vmatpush1.msra.mxu0 %v88
    %119 = vmatprep.subr.mxu0 0.0
    %120 = vmatpush1.msra.mxu0 %v89
    %121 = vmatprep.subr.mxu0 0.0
    %122 = vmatpush1.msra.mxu0 %v90
    %123 = vmatprep.subr.mxu0 0.0
    %124 = vmatpush1.msra.mxu0 0.0
    %125 = vmatprep.subr.mxu0 0.0
    %126 = vmatpush1.msra.mxu0 0.0
    %127 = vmatprep.subr.mxu0 0.0
    %128 = vmatpush1.msra.mxu0 0.0
    %129 = vmatprep.subr.mxu0 0.0
    %130 = vmatpush1.msra.mxu0 0.0
    %131 = vmatprep.subr.mxu0 0.0
    %132 = vmatpush1.msra.mxu0 0.0
    %133 = vmatprep.subr.mxu0 0.0
    %134 = vmatpush1.msra.mxu0 0.0
    %135 = vmatprep.subr.mxu0 0.0
    %136 = vmatpush1.msra.mxu0 0.0
    %137 = vmatprep.subr.mxu0 0.0
    %138 = vmatpush1.msra.mxu0 0.0
    %139 = vmatprep.subr.mxu0 0.0
    %140 = vmatpush1.msra.mxu0 0.0
    %141 = vmatprep.subr.mxu0 0.0
    %142 = vmatpush1.msra.mxu0 0.0
    %143 = vmatprep.subr.mxu0 0.0
    %144 = vmatpush1.msra.mxu0 0.0
    %145 = vmatprep.subr.mxu0 0.0
    %146 = vmatpush1.msra.mxu0 0.0
    %147 = vmatprep.subr.mxu0 0.0
    %148 = vmatpush1.msra.mxu0 0.0
    %149 = vmatprep.subr.mxu0 0.0
    %150 = vmatpush1.msra.mxu0 0.0
    %151 = vmatprep.subr.mxu0 0.0
    %152 = vmatpush1.msra.mxu0 0.0
    %153 = vmatprep.subr.mxu0 0.0
    %154 = vmatpush1.msra.mxu0 0.0
    %155 = vmatprep.mubr.f32.mxu0 0.0
    %156 = vmatmul.mubr.f32.gmra.mrb[0].mxu0 %v73
    %v157 = vpop.f32.mrb[0].mxu0
    %v158 = vadd.f32 0.0, %v157
    %v159 = vpop.f32.mrb[0].mxu0
    %160 = vdwg.mxu0
    %v161 = vadd.f32 %v74, %v158
    %162 = vst [vmem:[#allocation2] sm:$0xf] %v161
    // Predicated region
    $region42: #{tpu_custom_call.1} parent=1 // pred_check
      %p163 = pneg %p65
    $region43: #{tpu_custom_call.1} parent=1 // pred_check_branch
      %165 = sbr.rel (%p163) target = $region45
    $region44: #{tpu_custom_call.1} parent=1 // pred_region
      %v166 = vld [vmem:[#allocation2] sm:$0xf]
      %v167 = vld [vmem:[%s3] sm:$0x1]
      %v168 = vld [vmem:[%s4] sm:$0x1]
      %v170 = vlaneseq
      %v171 = vshrl.u32 %v170, 7
      %v172 = vsub.s32 0, %v171
      %v173 = vrot.slane %v168, %v172
      %v175 = vsub.f32 %v166, %v173
      %v177 = vlaneseq
      %v178 = vshrl.u32 %v177, 7
      %v179 = vsub.s32 0, %v178
      %v180 = vrot.slane %v167, %v179
      %v182 = vmul.f32 %v180, %v175
      %v183 = vld [vmem:[%s5] sm:$0xf]
      %v184 = vmul.f32 %v183, 0.05
      %v185 = vadd.f32 %v182, %v184
      %186 = vst [vmem:[#allocation9] sm:$0xf] %v185
      %v187 = vmax.f32 %v175, 0.0
      %v188 = vmul.f32 %v180, %v187
      %189 = vst [vmem:[#allocation10] sm:$0xf] %v188
      %vm190 = vcmp.gt.f32.partialorder %v175, 0.0
      %v191 = vsel %vm190, 1.0, 0.0
      %v192 = vmul.f32 %v180, %v191
      %193 = vst [vmem:[#allocation12] sm:$0xf] %v192
    $region45: #{tpu_custom_call.1} parent=1 // pred_fallthru
      _
    // Predicated region
    $region46: #{tpu_custom_call.1} parent=1 // pred_check
      _
    $region47: #{tpu_custom_call.1} parent=1 // pred_check_branch
      %195 = sbr.rel (0) target = $region49
    $region48: #{tpu_custom_call.1} parent=1 // pred_region
      %s197 = ssub.s32 64, 64
      %198 = vsyncadd [#allocation5], %s197
      %s200 = sshll.u32 [#allocation9], 4
      %s201 = int_to_ptr.vmem [resolvable:$true] %s200
      %203 = dma.vmem_to_hbm [thread:$0]  %s201, 64, %s6, [#allocation5]
    $region49: #{tpu_custom_call.1} parent=1 // pred_fallthru
      _
    // Predicated region
    $region50: #{tpu_custom_call.1} parent=1 // pred_check
      _
    $region51: #{tpu_custom_call.1} parent=1 // pred_check_branch
      %205 = sbr.rel (0) target = $region53
    $region52: #{tpu_custom_call.1} parent=1 // pred_region
      %s207 = ssub.s32 64, 64
      %208 = vsyncadd [#allocation11], %s207
      %s210 = sshll.u32 [#allocation10], 4
      %s211 = int_to_ptr.vmem [resolvable:$true] %s210
      %213 = dma.vmem_to_hbm [thread:$0]  %s211, 64, %s7, [#allocation11]
    $region53: #{tpu_custom_call.1} parent=1 // pred_fallthru
      _
    // Predicated region
    $region54: #{tpu_custom_call.1} parent=1 // pred_check
      _
    $region55: #{tpu_custom_call.1} parent=1 // pred_check_branch
      %215 = sbr.rel (0) target = $region57
    $region56: #{tpu_custom_call.1} parent=1 // pred_region
      %s217 = ssub.s32 64, 64
      %218 = vsyncadd [#allocation11], %s217
      %s220 = sshll.u32 [#allocation12], 4
      %s221 = int_to_ptr.vmem [resolvable:$true] %s220
      %223 = dma.vmem_to_hbm [thread:$0]  %s221, 64, %s8, [#allocation11]
    $region57: #{tpu_custom_call.1} parent=1 // pred_fallthru
      _
    // Predicated region
    $region58: #{tpu_custom_call.1} parent=1 // pred_check
      _
    $region59: #{tpu_custom_call.1} parent=1 // pred_check_branch
      %225 = sbr.rel (0) target = $region61
    $region60: #{tpu_custom_call.1} parent=1 // pred_region
      %226 = dma.done [#allocation5], 64
    $region61: #{tpu_custom_call.1} parent=1 // pred_fallthru
      _
    // Predicated region
    $region62: #{tpu_custom_call.1} parent=1 // pred_check
      _
    $region63: #{tpu_custom_call.1} parent=1 // pred_check_branch
      %228 = sbr.rel (0) target = $region65
    $region64: #{tpu_custom_call.1} parent=1 // pred_region
      %229 = dma.done [#allocation11], 64
    $region65: #{tpu_custom_call.1} parent=1 // pred_fallthru
      _
    // Predicated region
    $region66: #{tpu_custom_call.1} parent=1 // pred_check
      _
    $region67: #{tpu_custom_call.1} parent=1 // pred_check_branch
      %231 = sbr.rel (0) target = $region69
    $region68: #{tpu_custom_call.1} parent=1 // pred_region
      %232 = dma.done [#allocation11], 64
    $region69: #{tpu_custom_call.1} parent=1 // pred_fallthru
      _
    %233 = vsyncpa [#allocation4], 1
    %234 = vsyncpa [#allocation7], 1
    %235 = vsyncpa [#allocation5], 1
    %236 = vsyncpa [#allocation11], 1

</llo_original>
